<compile_context>
chip_gen: v6e
topology: v6e:2x2x1
jax: 0.10.0
libtpu: 0.0.40
codegen_flags: <defaults>
</compile_context>

<pallas_src>
import functools

import jax
import jax.numpy as jnp
from jax.experimental import pallas as pl
from jax.experimental.pallas import tpu as pltpu


def _round_up(v, m):
    return ((v + m - 1) // m) * m


def _choose_tiling(batch):
    """Pick (tile_b, padded_batch): >=2 tiles for megacore when B is large, small pad waste."""
    if batch <= 128:
        tile_b = _round_up(batch, 8)                 # single tile, <=7 padded rows
    else:
        # at least 2 tiles (shards the "parallel" axis over v7x's 2 TensorCores),
        # tiles capped near 512 rows, pad waste kept under 8 rows.
        n_tiles = max(2, -(-batch // 512))
        tile_b = _round_up(-(-batch // n_tiles), 8)
    return tile_b, _round_up(batch, tile_b)


def _vmem_limit_bytes(tile_b, d, n):
    # double-buffered x tile + probs tile, resident W^T / bias (Pallas still allocates two
    # buffers for constant index maps), tiny argmax/lse tiles, plus generous headroom.
    need = 4 * (2 * tile_b * d + 2 * d * n + 2 * n + 2 * tile_b * n + 4 * tile_b)
    return int(min(max(2 * need, 16 * 2**20), 48 * 2**20))   # stay under v7x's 64 MiB


def _linear_softmax_argmax_kernel(x_ref, wt_ref, b_ref, probs_ref, argmax_ref, lse_ref):
    # x_ref: (TB, D), wt_ref: (D, N), b_ref: (1, N)
    x = x_ref[...]
    wt = wt_ref[...]
    b = b_ref[...]

    # Linear: logits = x @ W^T + b as a canonical (TB,D)x(D,N) MXU matmul, f32 accumulation.
    logits = jax.lax.dot_general(
        x, wt,
        dimension_numbers=(((1,), (0,)), ((), ())),
        preferred_element_type=jnp.float32,
    ) + b                                                     # (TB, N)

    # Numerically stable softmax over dim=1; reciprocal goes to the EUP slot (approx).
    m = jnp.max(logits, axis=1, keepdims=True)
    e = jnp.exp(logits - m)
    denom = jnp.sum(e, axis=1, keepdims=True)
    probs = e * pl.reciprocal(denom, approx=True)
    probs_ref[...] = probs.astype(probs_ref.dtype)

    # Argmax from logits (softmax is monotonic -> same result), reusing the row max `m`.
    # First-occurrence tie-break matches torch.argmax.  Written as (TB, 1) int32: only
    # 4 B/row of writeback (the old 128-lane slab wrote 512 B/row).
    tb, n = logits.shape
    col_ids = jax.lax.broadcasted_iota(jnp.int32, (tb, n), 1)
    idx = jnp.min(jnp.where(logits == m, col_ids, jnp.int32(n)), axis=1, keepdims=True)
    argmax_ref[...] = idx.astype(jnp.int32)

    # logsumexp over each *probs* row (the module's loss is cross_entropy applied to the
    # softmax outputs, i.e. an intentional double softmax).  Values are live in vregs,
    # so emitting this here removes a second full pass over probs in the loss path.
    m2 = jnp.max(probs, axis=1, keepdims=True)
    lse_ref[...] = m2 + jnp.log(jnp.sum(jnp.exp(probs - m2), axis=1, keepdims=True))


def _core(x, weight, bias, tile_b, b_pad):
    """Everything traced inside a single jit: layout fixes, pad, pallas_call, un-pad."""
    b_rows, d = x.shape
    n = weight.shape[0]

    w_t = weight.T                       # (D, N): weight-stationary MXU layout
    bias2d = bias.reshape(1, n)
    if b_pad != b_rows:
        x = jnp.pad(x, ((0, b_pad - b_rows), (0, 0)))
    num_tiles = b_pad // tile_b

    cost = pl.CostEstimate(
        flops=2 * b_pad * d * n,
        transcendentals=2 * b_pad * n,                        # exp for softmax + exp for lse
        bytes_accessed=4 * (b_pad * d + d * n + n + b_pad * n + 2 * b_pad),
    )

    probs, argmax, lse = pl.pallas_call(
        _linear_softmax_argmax_kernel,
        out_shape=(
            jax.ShapeDtypeStruct((b_pad, n), jnp.float32),    # probs
            jax.ShapeDtypeStruct((b_pad, 1), jnp.int32),      # per-row argmax
            jax.ShapeDtypeStruct((b_pad, 1), jnp.float32),    # per-row logsumexp(probs)
        ),
        grid=(num_tiles,),
        in_specs=[
            pl.BlockSpec((tile_b, d), lambda i: (i, 0)),      # x: streamed per batch tile
            pl.BlockSpec((d, n), lambda i: (0, 0)),           # W^T: resident across the grid
            pl.BlockSpec((1, n), lambda i: (0, 0)),           # bias: resident
        ],
        out_specs=(
            pl.BlockSpec((tile_b, n), lambda i: (i, 0)),
            pl.BlockSpec((tile_b, 1), lambda i: (i, 0)),
            pl.BlockSpec((tile_b, 1), lambda i: (i, 0)),
        ),
        compiler_params=pltpu.CompilerParams(
            dimension_semantics=("parallel",),
            vmem_limit_bytes=_vmem_limit_bytes(tile_b, d, n),
        ),
        cost_estimate=cost,
    )(x, w_t, bias2d)

    return probs[:b_rows], argmax[:b_rows, 0], lse[:b_rows, 0]


@functools.partial(jax.jit, static_argnames=("tile_b", "b_pad"))
def _infer_jit(x, weight, bias, tile_b, b_pad):
    probs, argmax, _ = _core(x, weight, bias, tile_b, b_pad)
    return probs, argmax


@functools.partial(jax.jit, static_argnames=("tile_b", "b_pad"))
def _loss_jit(x, weight, bias, y, tile_b, b_pad):
    probs, _, lse = _core(x, weight, bias, tile_b, b_pad)
    # F.cross_entropy(y_pred, y) with y_pred = probs:
    #   loss_i = logsumexp(probs_i) - probs_i[y_i]; mean over rows.
    picked = jnp.take_along_axis(probs, y[:, None].astype(jnp.int32), axis=1)[:, 0]
    return jnp.mean(lse - picked)


def my_model_forward(x, weight, bias, y=None):
    """JAX/Pallas equivalent of MyModel.forward.

    x: (B, D) float32; weight: (N, D) PyTorch-style; bias: (N,).
    y is None  -> (list_of_argmax, y_pred) like the PyTorch module.
    y not None -> cross_entropy(y_pred, y) applied to the softmax outputs
                  (exactly the reference module's semantics — intentional double softmax).
    """
    b_rows = x.shape[0]
    tile_b, b_pad = _choose_tiling(b_rows)

    if y is not None:
        return _loss_jit(x, weight, bias, y, tile_b, b_pad)

    probs, argmax = _infer_jit(x, weight, bias, tile_b, b_pad)
    # Single device->host transfer, then build the Python list (mirrors the module's return).
    result = list(jax.device_get(argmax))
    return result, probs


if __name__ == "__main__":
    # Small shapes implied by the module: batch=8, input_size=32, output_size=16
    B, D, N = 8, 32, 16
    key = jax.random.PRNGKey(0)
    kx, kw, kb, ky = jax.random.split(key, 4)

    x = jax.random.normal(kx, (B, D), dtype=jnp.float32)
    # PyTorch nn.Linear parameter shapes: weight (out, in), bias (out,)
    weight = jax.random.normal(kw, (N, D), dtype=jnp.float32) * 0.1
    bias = jax.random.normal(kb, (N,), dtype=jnp.float32) * 0.1
    y = jax.random.randint(ky, (B,), 0, N, dtype=jnp.int32)

    # Inference path (y=None): returns ([argmax per row], y_pred)
    result, y_pred = my_model_forward(x, weight, bias)
    jax.block_until_ready(y_pred)

    # Training path: cross-entropy loss on the softmax outputs (module semantics)
    loss = my_model_forward(x, weight, bias, y)
    jax.block_until_ready(loss)

    # Plain-JAX reference (HIGHEST precision so the f32 MXU kernel is compared fairly).
    logits_ref = jnp.dot(x, weight.T, precision=jax.lax.Precision.HIGHEST) + bias
    probs_ref = jax.nn.softmax(logits_ref, axis=1)
    logp_ref = jax.nn.log_softmax(probs_ref, axis=1)   # CE applied to the softmax outputs
    loss_ref = -jnp.mean(jnp.take_along_axis(logp_ref, y[:, None], axis=1))

    assert jnp.allclose(y_pred, probs_ref, atol=2e-3, rtol=2e-3), "softmax probs mismatch"
    assert all(int(r) == int(a) for r, a in zip(result, jnp.argmax(probs_ref, axis=1))), \
        "argmax mismatch"
    assert jnp.isfinite(loss), "loss not finite"
    assert jnp.allclose(loss, loss_ref, atol=5e-3, rtol=5e-3), "loss mismatch"

    # Multi-tile / padded-batch path: exercises >=2 "parallel" grid tiles + row padding.
    B2 = 260
    x2 = jax.random.normal(kx, (B2, D), dtype=jnp.float32)
    result2, y_pred2 = my_model_forward(x2, weight, bias)
    jax.block_until_ready(y_pred2)
    probs_ref2 = jax.nn.softmax(
        jnp.dot(x2, weight.T, precision=jax.lax.Precision.HIGHEST) + bias, axis=1)
    assert y_pred2.shape == (B2, N), "padded rows leaked into the output"
    assert jnp.allclose(y_pred2, probs_ref2, atol=2e-3, rtol=2e-3), "multi-tile probs mismatch"
    assert all(int(r) == int(a) for r, a in zip(result2, jnp.argmax(probs_ref2, axis=1))), \
        "multi-tile argmax mismatch"

    print("KERNEL_OK")
</pallas_src>

<mosaic_0001>
module attributes {stable_mosaic.version = 11 : i64} {
  func.func @_linear_softmax_argmax_kernel(%arg0: i32, %arg1: memref<8x32xf32, #tpu.memory_space<vmem>>, %arg2: memref<32x16xf32, #tpu.memory_space<vmem>>, %arg3: memref<1x16xf32, #tpu.memory_space<vmem>>, %arg4: memref<8x16xf32, #tpu.memory_space<vmem>>, %arg5: memref<8x1xi32, #tpu.memory_space<vmem>>, %arg6: memref<8x1xf32, #tpu.memory_space<vmem>>) attributes {dimension_semantics = [#tpu.dimension_semantics<parallel>], iteration_bounds = array<i64: 1>, scalar_prefetch = 0 : i64, scratch_operands = 0 : i64, tpu.core_type = #tpu.core_type<tc>, window_params = [{transform_indices = @transform_0, window_bounds = array<i64: 8, 32>}, {pipeline_mode = #tpu.pipeline_mode<synchronous>, transform_indices = @transform_1, window_bounds = array<i64: 32, 16>}, {pipeline_mode = #tpu.pipeline_mode<synchronous>, transform_indices = @transform_2, window_bounds = array<i64: 1, 16>}, {transform_indices = @transform_3, window_bounds = array<i64: 8, 16>}, {transform_indices = @transform_4, window_bounds = array<i64: 8, 1>}, {transform_indices = @transform_5, window_bounds = array<i64: 8, 1>}]} {
    %c0 = arith.constant 0 : index
    %c0_0 = arith.constant 0 : index
    %0 = vector.load %arg1[%c0, %c0_0] : memref<8x32xf32, #tpu.memory_space<vmem>>, vector<8x32xf32>
    %c0_1 = arith.constant 0 : index
    %c0_2 = arith.constant 0 : index
    %1 = vector.load %arg2[%c0_1, %c0_2] : memref<32x16xf32, #tpu.memory_space<vmem>>, vector<32x16xf32>
    %c0_3 = arith.constant 0 : index
    %c0_4 = arith.constant 0 : index
    %2 = vector.load %arg3[%c0_3, %c0_4] : memref<1x16xf32, #tpu.memory_space<vmem>>, vector<1x16xf32>
    %cst = arith.constant dense<0.000000e+00> : vector<8x16xf32>
    %3 = tpu.matmul %0, %1, %cst {dimension_numbers = #tpu.dot_dimension_numbers<[1], [0], [0], [1], [0, 0, 1, 1], [], []>} : vector<8x32xf32>, vector<32x16xf32>, vector<8x16xf32> -> vector<8x16xf32>
    %4 = vector.broadcast %2 : vector<1x16xf32> to vector<8x16xf32>
    %5 = arith.addf %3, %4 : vector<8x16xf32>
    %cst_5 = arith.constant dense<0xFF800000> : vector<8xf32>
    %6 = vector.multi_reduction <maximumf>, %5, %cst_5 [1] : vector<8x16xf32> to vector<8xf32>
    %7 = vector.shape_cast %6 : vector<8xf32> to vector<8x1xf32>
    %8 = vector.broadcast %7 : vector<8x1xf32> to vector<8x16xf32>
    %9 = arith.subf %5, %8 : vector<8x16xf32>
    %10 = math.exp %9 : vector<8x16xf32>
    %cst_6 = arith.constant dense<0.000000e+00> : vector<8xf32>
    %11 = vector.multi_reduction <add>, %10, %cst_6 [1] : vector<8x16xf32> to vector<8xf32>
    %12 = vector.shape_cast %11 : vector<8xf32> to vector<8x1xf32>
    %13 = tpu.reciprocal %12 {approx = true} : vector<8x1xf32> -> vector<8x1xf32>
    %14 = vector.broadcast %13 : vector<8x1xf32> to vector<8x16xf32>
    %15 = arith.mulf %10, %14 : vector<8x16xf32>
    %c0_7 = arith.constant 0 : index
    %c0_8 = arith.constant 0 : index
    %16 = vector.load %arg4[%c0_7, %c0_8] : memref<8x16xf32, #tpu.memory_space<vmem>>, vector<8x16xf32>
    tpu.vector_store %arg4[%c0_7, %c0_8], %15 {strides = array<i32>} : memref<8x16xf32, #tpu.memory_space<vmem>>, vector<8x16xf32>,
    %17 = tpu.iota {dimensions = array<i32: 1>} : vector<8x16xi32>
    %18 = vector.broadcast %7 : vector<8x1xf32> to vector<8x16xf32>
    %19 = arith.cmpf oeq, %5, %18 : vector<8x16xf32>
    %c16_i32 = arith.constant 16 : i32
    %20 = vector.broadcast %c16_i32 : i32 to vector<8x16xi32>
    %21 = arith.select %19, %17, %20 : vector<8x16xi1>, vector<8x16xi32>
    %cst_9 = arith.constant dense<2147483647> : vector<8xi32>
    %22 = vector.multi_reduction <minsi>, %21, %cst_9 [1] : vector<8x16xi32> to vector<8xi32>
    %23 = vector.shape_cast %22 : vector<8xi32> to vector<8x1xi32>
    %c0_10 = arith.constant 0 : index
    %c0_11 = arith.constant 0 : index
    %24 = vector.load %arg5[%c0_10, %c0_11] : memref<8x1xi32, #tpu.memory_space<vmem>>, vector<8x1xi32>
    tpu.vector_store %arg5[%c0_10, %c0_11], %23 {strides = array<i32>} : memref<8x1xi32, #tpu.memory_space<vmem>>, vector<8x1xi32>,
    %cst_12 = arith.constant dense<0xFF800000> : vector<8xf32>
    %25 = vector.multi_reduction <maximumf>, %15, %cst_12 [1] : vector<8x16xf32> to vector<8xf32>
    %26 = vector.shape_cast %25 : vector<8xf32> to vector<8x1xf32>
    %27 = vector.broadcast %26 : vector<8x1xf32> to vector<8x16xf32>
    %28 = arith.subf %15, %27 : vector<8x16xf32>
    %29 = math.exp %28 : vector<8x16xf32>
    %cst_13 = arith.constant dense<0.000000e+00> : vector<8xf32>
    %30 = vector.multi_reduction <add>, %29, %cst_13 [1] : vector<8x16xf32> to vector<8xf32>
    %31 = vector.shape_cast %30 : vector<8xf32> to vector<8x1xf32>
    %32 = math.log %31 : vector<8x1xf32>
    %33 = arith.addf %26, %32 : vector<8x1xf32>
    %c0_14 = arith.constant 0 : index
    %c0_15 = arith.constant 0 : index
    %34 = vector.load %arg6[%c0_14, %c0_15] : memref<8x1xf32, #tpu.memory_space<vmem>>, vector<8x1xf32>
    tpu.vector_store %arg6[%c0_14, %c0_15], %33 {strides = array<i32>} : memref<8x1xf32, #tpu.memory_space<vmem>>, vector<8x1xf32>,
    return
  }
  func.func @transform_0(%arg0: i32) -> (i32, i32) {
    %c0_i32 = arith.constant 0 : i32
    %c0_i32_0 = arith.constant 0 : i32
    return %arg0, %c0_i32 : i32, i32
  }
  func.func @transform_1(%arg0: i32) -> (i32, i32) {
    %c0_i32 = arith.constant 0 : i32
    %c0_i32_0 = arith.constant 0 : i32
    %c0_i32_1 = arith.constant 0 : i32
    return %c0_i32, %c0_i32_0 : i32, i32
  }
  func.func @transform_2(%arg0: i32) -> (i32, i32) {
    %c0_i32 = arith.constant 0 : i32
    %c0_i32_0 = arith.constant 0 : i32
    %c0_i32_1 = arith.constant 0 : i32
    return %c0_i32, %c0_i32_0 : i32, i32
  }
  func.func @transform_3(%arg0: i32) -> (i32, i32) {
    %c0_i32 = arith.constant 0 : i32
    %c0_i32_0 = arith.constant 0 : i32
    return %arg0, %c0_i32 : i32, i32
  }
  func.func @transform_4(%arg0: i32) -> (i32, i32) {
    %c0_i32 = arith.constant 0 : i32
    %c0_i32_0 = arith.constant 0 : i32
    return %arg0, %c0_i32 : i32, i32
  }
  func.func @transform_5(%arg0: i32) -> (i32, i32) {
    %c0_i32 = arith.constant 0 : i32
    %c0_i32_0 = arith.constant 0 : i32
    return %arg0, %c0_i32 : i32, i32
  }
}

</mosaic_0001>

<llo_original>
// kernel: _infer_jit.1
$region0: #{_infer_jit.1}
  #allocation0 [shape = 'u32[]', space=smem, size = 0x4, offset = 0x4, fixed_abs, tag = 'smem constant byte address 0x4 - core index']
  #allocation1 [shape = 'u32[144,128]{1,0:T(1,128)}', space=vmem, size = 0x12000, scoped, tag = 'internal scratch']
  %s0 = inlined_call_operand.vmem [shape: f32[8,32], index: 0, kind: input, shape index: {}]
  %s1 = inlined_call_operand.vmem [shape: f32[32,16], index: 1, kind: input, shape index: {}]
  %s2 = inlined_call_operand.vmem [shape: f32[1,16], index: 2, kind: input, shape index: {}]
  %s3 = inlined_call_operand.hbm [shape: f32[8,16], index: 3, kind: output, shape index: {0}]
  %s4 = inlined_call_operand.vmem [shape: s32[8,1], index: 4, kind: output, shape index: {1}]
  %s5 = inlined_call_operand.hbm [shape: f32[8,1], index: 5, kind: output, shape index: {2}]
  %6 = xla_tuple %s3, %s4, %s5
  %s7 = sld [smem:[#allocation0]]
  $region38: #{_infer_jit.1} parent=0
    _
  %s9 = ssub.s32 1, %s7
  %s10 = scalar_select 0, %s9, %s7
  $region1: #{_infer_jit.1} parent=0
    #allocation2 [shape = 'u8[4096]{0}', space=vmem, size = 0x1000, scoped, tag = 'output window, operand 0, single buffered']
    #allocation3 [shape = 's32[1]{0}', space=sflag, size = 0x4, scoped, tag = 'scoped memory for _infer_jit.1']
    #allocation4 [shape = 'u8[4096]{0}', space=vmem, size = 0x1000, scoped, tag = 'output window, operand 2, single buffered']
    #allocation5 [shape = 's32[1]{0}', space=sflag, size = 0x4, scoped, tag = 'scoped memory for _infer_jit.1']
    %11 = vsyncpa [#allocation3], 0
    %12 = vsyncpa [#allocation5], 0
    // Predicated region
    $region2: #{_infer_jit.1} parent=1 // pred_check
      _
    $region3: #{_infer_jit.1} parent=1 // pred_check_branch
      %14 = sbr.rel (0) target = $region5
    $region4: #{_infer_jit.1} parent=1 // pred_region
      _
    $region5: #{_infer_jit.1} parent=1 // pred_fallthru
      _
    // Predicated region
    $region6: #{_infer_jit.1} parent=1 // pred_check
      _
    $region7: #{_infer_jit.1} parent=1 // pred_check_branch
      %16 = sbr.rel (0) target = $region9
    $region8: #{_infer_jit.1} parent=1 // pred_region
      _
    $region9: #{_infer_jit.1} parent=1 // pred_fallthru
      _
    // Predicated region
    $region10: #{_infer_jit.1} parent=1 // pred_check
      _
    $region11: #{_infer_jit.1} parent=1 // pred_check_branch
      %18 = sbr.rel (0) target = $region13
    $region12: #{_infer_jit.1} parent=1 // pred_region
      _
    $region13: #{_infer_jit.1} parent=1 // pred_fallthru
      _
    %v19 = vld [vmem:[%s0] sm:$0xff]
    %v20 = vld [vmem:[%s1] sm:$0xff]
    %v21 = vld [vmem:[%s1 + $0x8] sm:$0xff]
    %v22 = vld [vmem:[%s1 + $0x10] sm:$0xff]
    %v23 = vld [vmem:[%s1 + $0x18] sm:$0xff]
    %v24 = vld [vmem:[%s2] sm:$0x1]
    %v26 = vlaneseq
    %v27 = vshrl.u32 %v26, 7
    %v28 = vsub.s32 0, %v27
    %v29 = vrot.slane %v24, %v28
    %vm31 = vcmask 261120
    %v33 = vsel %vm31, %v19, 0
    %35 = vmatprep.subr.mxu0 0.0
    %36 = vmatpush1.msra.mxu0 0.0
    %37 = vmatprep.subr.mxu0 0.0
    %38 = vmatpush1.msra.mxu0 0.0
    %39 = vmatprep.subr.mxu0 0.0
    %40 = vmatpush1.msra.mxu0 0.0
    %41 = vmatprep.subr.mxu0 0.0
    %42 = vmatpush1.msra.mxu0 0.0
    %43 = vmatprep.subr.mxu0 0.0
    %44 = vmatpush1.msra.mxu0 0.0
    %45 = vmatprep.subr.mxu0 0.0
    %46 = vmatpush1.msra.mxu0 0.0
    %47 = vmatprep.subr.mxu0 0.0
    %48 = vmatpush1.msra.mxu0 0.0
    %49 = vmatprep.subr.mxu0 0.0
    %50 = vmatpush1.msra.mxu0 0.0
    %51 = vmatprep.subr.mxu0 0.0
    %52 = vmatpush1.msra.mxu0 0.0
    %53 = vmatprep.subr.mxu0 0.0
    %54 = vmatpush1.msra.mxu0 0.0
    %55 = vmatprep.subr.mxu0 0.0
    %56 = vmatpush1.msra.mxu0 0.0
    %57 = vmatprep.subr.mxu0 0.0
    %58 = vmatpush1.msra.mxu0 0.0
    %59 = vmatprep.subr.mxu0 0.0
    %60 = vmatpush1.msra.mxu0 %v23
    %61 = vmatprep.subr.mxu0 0.0
    %62 = vmatpush1.msra.mxu0 %v22
    %63 = vmatprep.subr.mxu0 0.0
    %64 = vmatpush1.msra.mxu0 %v21
    %65 = vmatprep.subr.mxu0 0.0
    %66 = vmatpush1.msra.mxu0 %v20
    %67 = vmatprep.subr.mxu0 0.0
    %68 = vmatpush2.msra.mxu0 0.0
    %69 = vmatprep.subr.mxu0 0.0
    %70 = vmatpush2.msra.mxu0 0.0
    %71 = vmatprep.subr.mxu0 0.0
    %72 = vmatpush2.msra.mxu0 0.0
    %73 = vmatprep.subr.mxu0 0.0
    %74 = vmatpush2.msra.mxu0 0.0
    %75 = vmatprep.subr.mxu0 0.0
    %76 = vmatpush2.msra.mxu0 0.0
    %77 = vmatprep.subr.mxu0 0.0
    %78 = vmatpush2.msra.mxu0 0.0
    %79 = vmatprep.subr.mxu0 0.0
    %80 = vmatpush2.msra.mxu0 0.0
    %81 = vmatprep.subr.mxu0 0.0
    %82 = vmatpush2.msra.mxu0 0.0
    %83 = vmatprep.subr.mxu0 0.0
    %84 = vmatpush2.msra.mxu0 0.0
    %85 = vmatprep.subr.mxu0 0.0
    %86 = vmatpush2.msra.mxu0 0.0
    %87 = vmatprep.subr.mxu0 0.0
    %88 = vmatpush2.msra.mxu0 0.0
    %89 = vmatprep.subr.mxu0 0.0
    %90 = vmatpush2.msra.mxu0 0.0
    %91 = vmatprep.subr.mxu0 0.0
    %92 = vmatpush2.msra.mxu0 0.0
    %93 = vmatprep.subr.mxu0 0.0
    %94 = vmatpush2.msra.mxu0 0.0
    %95 = vmatprep.subr.mxu0 0.0
    %96 = vmatpush2.msra.mxu0 0.0
    %97 = vmatprep.subr.mxu0 0.0
    %98 = vmatpush2.msra.mxu0 0.0
    %99 = vmatprep.mubr.f32.mxu0 0.0
    %100 = vmatmul.mubr.f32.gmra.mxu0 %v33
    %v101 = vpop.f32.mrf.mxu0
    %v102 = vadd.f32 %v29, %v101
    %v103 = vpop.f32.mrf.mxu0
    %104 = vdwg.mxu0
    %vm105 = vcmask 130048
    %v106 = vsel %vm105, %v102, -inf
    %107 = vmax.xlane.f32.xlu0 %v106
    %v108 = vpop.xlane.xlu0 %107
    %v109 = vsub.f32 %v102, %v108
    %v110 = vmul.f32 %v109, 1.442695
    %v111 = vpow.pop %v110
    %v112 = vsel %vm105, %v111, 0.0
    %113 = vadd.xlane.f32.xlu0 %v112
    %v114 = vpop.xlane.xlu0 %113
    %v115 = vrcp.pop %v114
    %v116 = vmul.f32 %v111, %v115
    %117 = vst.msk [vmem:[#allocation2] sm:$0xff] %vm105, %v116
    %v118 = vlaneseq
    %v119 = vand.u32 %v118, 127
    %vm120 = vcmp.eq.f32.partialorder %v102, %v108
    %v121 = vsel %vm120, %v119, 16
    %v122 = vsel %vm105, %v121, 2147483647
    %v123 = vand.u32 %v122, 65535
    %v124 = vshra.s32 %v122, 16
    %v125 = vcvt.s32.f32 %v123
    %v126 = vcvt.s32.f32 %v124
    %127 = vmin.xlane.f32.xlu0 %v126
    %v128 = vpop.xlane.xlu0 %127
    %vm129 = vcmp.eq.f32.partialorder %v126, %v128
    %v130 = vsel %vm129, %v125, inf
    %131 = vmin.xlane.f32.xlu0 %v130
    %v132 = vpop.xlane.xlu0 %131
    %v133 = vcvt.f32.s32 %v132
    %v134 = vcvt.f32.s32 %v128
    %v135 = vshll.u32 %v134, 16
    %v136 = vadd.s32 %v135, %v133
    %vm137 = vcmask 7168
    %138 = vst.msk [vmem:[%s4] sm:$0xff] %vm137, %v136
    %v139 = vsel %vm105, %v116, -inf
    %140 = vmax.xlane.f32.xlu0 %v139
    %v141 = vpop.xlane.xlu0 %140
    %v142 = vsub.f32 %v116, %v141
    %v143 = vmul.f32 %v142, 1.442695
    %v144 = vpow.pop %v143
    %v145 = vsel %vm105, %v144, 0.0
    %146 = vadd.xlane.f32.xlu0 %v145
    %v147 = vpop.xlane.xlu0 %146
    %v148 = vlog2.pop %v147
    %v149 = vmul.f32 %v148, 0.6931472
    %v150 = vadd.f32 %v141, %v149
    %151 = vst.msk [vmem:[#allocation4] sm:$0xff] %vm137, %v150
    // Predicated region
    $region14: #{_infer_jit.1} parent=1 // pred_check
      _
    $region15: #{_infer_jit.1} parent=1 // pred_check_branch
      %153 = sbr.rel (0) target = $region17
    $region16: #{_infer_jit.1} parent=1 // pred_region
      %s155 = ssub.s32 128, 128
      %156 = vsyncadd [#allocation3], %s155
      %s158 = sshll.u32 [#allocation2], 4
      %s159 = int_to_ptr.vmem [resolvable:$true] %s158
      %161 = dma.vmem_to_hbm [thread:$0]  %s159, 128, %s3, [#allocation3]
    $region17: #{_infer_jit.1} parent=1 // pred_fallthru
      _
    // Predicated region
    $region18: #{_infer_jit.1} parent=1 // pred_check
      _
    $region19: #{_infer_jit.1} parent=1 // pred_check_branch
      %163 = sbr.rel (0) target = $region21
    $region20: #{_infer_jit.1} parent=1 // pred_region
      _
    $region21: #{_infer_jit.1} parent=1 // pred_fallthru
      _
    // Predicated region
    $region22: #{_infer_jit.1} parent=1 // pred_check
      _
    $region23: #{_infer_jit.1} parent=1 // pred_check_branch
      %165 = sbr.rel (0) target = $region25
    $region24: #{_infer_jit.1} parent=1 // pred_region
      %s167 = ssub.s32 128, 128
      %168 = vsyncadd [#allocation5], %s167
      %s170 = sshll.u32 [#allocation4], 4
      %s171 = int_to_ptr.vmem [resolvable:$true] %s170
      %173 = dma.vmem_to_hbm [thread:$0]  %s171, 128, %s5, [#allocation5]
    $region25: #{_infer_jit.1} parent=1 // pred_fallthru
      _
    // Predicated region
    $region26: #{_infer_jit.1} parent=1 // pred_check
      _
    $region27: #{_infer_jit.1} parent=1 // pred_check_branch
      %175 = sbr.rel (0) target = $region29
    $region28: #{_infer_jit.1} parent=1 // pred_region
      %176 = dma.done [#allocation3], 128
    $region29: #{_infer_jit.1} parent=1 // pred_fallthru
      _
    // Predicated region
    $region30: #{_infer_jit.1} parent=1 // pred_check
      _
    $region31: #{_infer_jit.1} parent=1 // pred_check_branch
      %178 = sbr.rel (0) target = $region33
    $region32: #{_infer_jit.1} parent=1 // pred_region
      _
    $region33: #{_infer_jit.1} parent=1 // pred_fallthru
      _
    // Predicated region
    $region34: #{_infer_jit.1} parent=1 // pred_check
      _
    $region35: #{_infer_jit.1} parent=1 // pred_check_branch
      %180 = sbr.rel (0) target = $region37
    $region36: #{_infer_jit.1} parent=1 // pred_region
      %181 = dma.done [#allocation5], 128
    $region37: #{_infer_jit.1} parent=1 // pred_fallthru
      _
    %182 = vsyncpa [#allocation3], 1
    %183 = vsyncpa [#allocation5], 1

</llo_original>
